<compile_context>
chip_gen: v5e
topology: v5e:2x2
jax: 0.10.0
libtpu: 0.0.40
codegen_flags: <defaults>
</compile_context>

<pallas_src>
import functools

import jax
import jax.numpy as jnp
from jax import lax
from jax.experimental import pallas as pl
from jax.experimental.pallas import tpu as pltpu

ALPHA = 0.25
GAMMA = 2.0          # fixed; focal term lowered to q*q (exact for gamma == 2)
EPS = 1e-6

TL = 128             # lane width
CHUNK = 512          # rows per in-kernel elementwise chunk (bounds VMEM temps)


def _round_up(n, m):
    return ((n + m - 1) // m) * m


def _focal_loss_kernel(x_ref, t_ref, o_ref, *, rows, tr, chunk_rows, n_chunks,
                       s_per, ragged):
    """Accumulates per-lane partial focal-loss sums into o_ref (8, 128)."""
    p_id = pl.program_id(0)          # parallel stripe (megacore on v7x)
    s = pl.program_id(1)             # reduction step within the stripe

    @pl.when(s == 0)
    def _():
        o_ref[...] = jnp.zeros_like(o_ref)

    blk = p_id * s_per + s           # nominal block index (may overhang; masked)

    def loss_chunk(x_raw, t_raw, base_row, mask):
        x = x_raw.astype(jnp.float32)
        t = t_raw.astype(jnp.float32)

        # exp(-|x|) computed once; reused for sigmoid and the stable BCE log.
        e = jnp.exp(-jnp.abs(x))
        inv = pl.reciprocal(1.0 + e, approx=False)
        p = jnp.where(x >= 0.0, inv, e * inv)          # == sigmoid(x)
        p = jnp.clip(p, EPS, 1.0 - EPS)

        # Stable BCE-with-logits: max(x,0) - x*t + log(1 + exp(-|x|))
        ce = jnp.maximum(x, 0.0) - x * t + jnp.log1p(e)

        # q == 1 - p_t ; alpha_factor rewritten -> fewer VALU ops/element.
        q = t + p * (1.0 - 2.0 * t)
        alpha_factor = (1.0 - ALPHA) - (1.0 - 2.0 * ALPHA) * t
        loss = alpha_factor * (q * q) * ce             # gamma = 2 -> q*q

        if mask:
            # Row mask only (every kernel row is a full 128-lane row); int32-safe.
            row_ids = lax.broadcasted_iota(jnp.int32, loss.shape, 0)
            loss = jnp.where(base_row + row_ids < rows, loss, 0.0)

        # (chunk,128) -> (chunk//8, 8, 128) summed over the leading axis:
        # pure VPU adds into the single-vreg accumulator.
        o_ref[...] += loss.reshape(chunk_rows // 8, 8, TL).sum(axis=0)

    def run_block(mask):
        if n_chunks == 1:
            loss_chunk(x_ref[...], t_ref[...], blk * tr, mask)
        else:
            def body(c, carry):
                off = pl.multiple_of(c * chunk_rows, chunk_rows)
                loss_chunk(x_ref[pl.ds(off, chunk_rows), :],
                           t_ref[pl.ds(off, chunk_rows), :],
                           blk * tr + off, mask)
                return carry
            lax.fori_loop(0, n_chunks, body, 0, unroll=2)

    if ragged:
        needs_mask = (blk + 1) * tr > rows

        @pl.when(jnp.logical_not(needs_mask))
        def _():
            run_block(mask=False)

        @pl.when(needs_mask)
        def _():
            run_block(mask=True)
    else:
        run_block(mask=False)


def _focal_elementwise(x, t):
    """Plain-JAX per-element focal loss (used for the tiny unaligned tail)."""
    x = x.astype(jnp.float32)
    t = t.astype(jnp.float32)
    p = jnp.clip(jax.nn.sigmoid(x), EPS, 1.0 - EPS)
    ce = jnp.maximum(x, 0.0) - x * t + jnp.log1p(jnp.exp(-jnp.abs(x)))
    p_t = t * p + (1.0 - t) * (1.0 - p)
    af = t * ALPHA + (1.0 - t) * (1.0 - ALPHA)
    return af * (1.0 - p_t) ** GAMMA * ce


def focal_loss(inputs: jax.Array, targets: jax.Array) -> jax.Array:
    """Focal loss with reduction='mean'. inputs/targets: same shape, any rank."""
    assert inputs.shape == targets.shape
    n_valid = int(inputs.size)
    if n_valid == 0:
        return jnp.float32(0.0)

    # Flatten (free for contiguous arrays); keep native dtype so bf16 inputs
    # don't pay an f32 HBM pass -- the kernel upcasts after the load.
    # (If targets are known hard 0/1 labels, casting them to bf16 here would
    #  exactly halve their HBM stream -- left to the caller.)
    x_flat = inputs.reshape(-1)
    t_flat = targets.reshape(-1)

    rows = n_valid // TL
    rem = n_valid - rows * TL

    if rows == 0:   # fewer than 128 elements: plain JAX is the right tool
        return jnp.sum(_focal_elementwise(x_flat, t_flat)) / jnp.float32(n_valid)

    # No jnp.pad: kernel consumes the 128-aligned prefix; tail handled in JAX.
    if rem:
        x2 = x_flat[: rows * TL].reshape(rows, TL)
        t2 = t_flat[: rows * TL].reshape(rows, TL)
    else:
        x2 = x_flat.reshape(rows, TL)
        t2 = t_flat.reshape(rows, TL)

    itemsize = max(jnp.dtype(x2.dtype).itemsize, jnp.dtype(t2.dtype).itemsize)
    tr_max = 8192 if itemsize <= 2 else 4096        # ~2 MiB/input/step

    rows_8 = _round_up(rows, 8)
    if rows_8 <= CHUNK:
        tr = rows_8
        chunk_rows = tr
    else:
        tr = min(tr_max, _round_up(rows_8, CHUNK))  # multiple of CHUNK
        chunk_rows = CHUNK
    n_chunks = tr // chunk_rows

    steps = pl.cdiv(rows, tr)
    # Always split across 2 stripes when there are >=2 blocks so neither v7x
    # TensorCore idles; the possible overhang block is clamped + masked.
    n_par = 2 if steps >= 2 else 1
    s_per = pl.cdiv(steps, n_par)
    ragged = (n_par * s_per * tr) != rows

    idx_map = lambda p, s, _sp=s_per, _last=steps - 1: (
        jnp.minimum(p * _sp + s, _last), 0)

    kernel = functools.partial(
        _focal_loss_kernel, rows=rows, tr=tr, chunk_rows=chunk_rows,
        n_chunks=n_chunks, s_per=s_per, ragged=ragged)

    out = pl.pallas_call(
        kernel,
        out_shape=jax.ShapeDtypeStruct((n_par * 8, TL), jnp.float32),
        grid_spec=pltpu.PrefetchScalarGridSpec(
            num_scalar_prefetch=0,
            grid=(n_par, s_per),
            in_specs=[
                pl.BlockSpec((tr, TL), idx_map),
                pl.BlockSpec((tr, TL), idx_map),
            ],
            out_specs=pl.BlockSpec((8, TL), lambda p, s: (p, 0)),
        ),
        compiler_params=pltpu.CompilerParams(
            dimension_semantics=("parallel", "arbitrary"),
            vmem_limit_bytes=48 * 1024 * 1024,
        ),
    )(x2, t2)

    # Tiny epilogue: cross-lane reduce of the partials, add the <=127-elem
    # tail (plain JAX), then the mean divide.
    total = jnp.sum(out)
    if rem:
        total = total + jnp.sum(_focal_elementwise(x_flat[rows * TL:],
                                                   t_flat[rows * TL:]))
    return total / jnp.float32(n_valid)


def _focal_loss_ref(inputs, targets):
    """Pure-JAX reference matching the PyTorch module exactly."""
    return jnp.mean(_focal_elementwise(inputs, targets))


if __name__ == "__main__":
    key = jax.random.PRNGKey(0)

    cases = [
        (2, 4, 16, 16),     # detector-head NCHW, tile-aligned, single block
        (3, 5, 7, 11),      # non-128-multiple -> JAX tail + in-kernel row mask
        (8, 8, 64, 64),     # larger single-block case
        (2, 4, 255, 301),   # multi-block: megacore split + chunk loop + mask
    ]
    for shape in cases:
        key, k1, k2 = jax.random.split(key, 3)
        x = jax.random.normal(k1, shape, dtype=jnp.float32) * 2.0
        t = (jax.random.uniform(k2, shape) > 0.8).astype(jnp.float32)

        got = jax.block_until_ready(focal_loss(x, t))
        ref = jax.block_until_ready(_focal_loss_ref(x, t))
        assert jnp.allclose(got, ref, rtol=5e-5, atol=1e-6), (
            shape, float(got), float(ref))

    print("KERNEL_OK")
</pallas_src>

<mosaic_0001>
module attributes {stable_mosaic.version = 11 : i64} {
  func.func @_focal_loss_kernel(%arg0: i32, %arg1: i32, %arg2: memref<16x128xf32, #tpu.memory_space<vmem>>, %arg3: memref<16x128xf32, #tpu.memory_space<vmem>>, %arg4: memref<8x128xf32, #tpu.memory_space<vmem>>) attributes {dimension_semantics = [#tpu.dimension_semantics<parallel>, #tpu.dimension_semantics<arbitrary>], iteration_bounds = array<i64: 1, 1>, scalar_prefetch = 0 : i64, scratch_operands = 0 : i64, tpu.core_type = #tpu.core_type<tc>, window_params = [{transform_indices = @transform_0, window_bounds = array<i64: 16, 128>}, {transform_indices = @transform_1, window_bounds = array<i64: 16, 128>}, {transform_indices = @transform_2, window_bounds = array<i64: 8, 128>}]} {
    %c0_i32 = arith.constant 0 : i32
    %0 = arith.cmpi eq, %arg1, %c0_i32 : i32
    %1 = arith.extui %0 : i1 to i32
    %c0_i32_0 = arith.constant 0 : i32
    %2 = arith.cmpi ne, %1, %c0_i32_0 : i32
    scf.if %2 {
      %cst_18 = arith.constant 0.000000e+00 : f32
      %44 = vector.broadcast %cst_18 : f32 to vector<8x128xf32>
      %c0_19 = arith.constant 0 : index
      %c0_20 = arith.constant 0 : index
      %45 = vector.load %arg4[%c0_19, %c0_20] : memref<8x128xf32, #tpu.memory_space<vmem>>, vector<8x128xf32>
      tpu.vector_store %arg4[%c0_19, %c0_20], %44 {strides = array<i32>} : memref<8x128xf32, #tpu.memory_space<vmem>>, vector<8x128xf32>,
    } else {
    }
    %c0 = arith.constant 0 : index
    %c0_1 = arith.constant 0 : index
    %3 = vector.load %arg2[%c0, %c0_1] : memref<16x128xf32, #tpu.memory_space<vmem>>, vector<16x128xf32>
    %c0_2 = arith.constant 0 : index
    %c0_3 = arith.constant 0 : index
    %4 = vector.load %arg3[%c0_2, %c0_3] : memref<16x128xf32, #tpu.memory_space<vmem>>, vector<16x128xf32>
    %5 = math.absf %3 : vector<16x128xf32>
    %cst = arith.constant 0.000000e+00 : f32
    %6 = vector.broadcast %cst : f32 to vector<16x128xf32>
    %7 = arith.subf %6, %5 : vector<16x128xf32>
    %8 = math.exp %7 : vector<16x128xf32>
    %cst_4 = arith.constant 1.000000e+00 : f32
    %9 = vector.broadcast %cst_4 : f32 to vector<16x128xf32>
    %10 = arith.addf %9, %8 : vector<16x128xf32>
    %11 = tpu.reciprocal %10 : vector<16x128xf32> -> vector<16x128xf32>
    %cst_5 = arith.constant 0.000000e+00 : f32
    %12 = vector.broadcast %cst_5 : f32 to vector<16x128xf32>
    %13 = arith.cmpf oge, %3, %12 : vector<16x128xf32>
    %14 = arith.mulf %8, %11 : vector<16x128xf32>
    %15 = arith.select %13, %11, %14 : vector<16x128xi1>, vector<16x128xf32>
    %cst_6 = arith.constant 9.99999997E-7 : f32
    %cst_7 = arith.constant 0.999998986 : f32
    %16 = vector.broadcast %cst_6 : f32 to vector<16x128xf32>
    %17 = arith.maximumf %16, %15 : vector<16x128xf32>
    %18 = vector.broadcast %cst_7 : f32 to vector<16x128xf32>
    %19 = arith.minimumf %18, %17 : vector<16x128xf32>
    %cst_8 = arith.constant 0.000000e+00 : f32
    %20 = vector.broadcast %cst_8 : f32 to vector<16x128xf32>
    %21 = arith.maximumf %3, %20 : vector<16x128xf32>
    %22 = arith.mulf %3, %4 : vector<16x128xf32>
    %23 = arith.subf %21, %22 : vector<16x128xf32>
    %24 = math.log1p %8 : vector<16x128xf32>
    %25 = arith.addf %23, %24 : vector<16x128xf32>
    %cst_9 = arith.constant 2.000000e+00 : f32
    %26 = vector.broadcast %cst_9 : f32 to vector<16x128xf32>
    %27 = arith.mulf %26, %4 : vector<16x128xf32>
    %cst_10 = arith.constant 1.000000e+00 : f32
    %28 = vector.broadcast %cst_10 : f32 to vector<16x128xf32>
    %29 = arith.subf %28, %27 : vector<16x128xf32>
    %30 = arith.mulf %19, %29 : vector<16x128xf32>
    %31 = arith.addf %4, %30 : vector<16x128xf32>
    %cst_11 = arith.constant 5.000000e-01 : f32
    %32 = vector.broadcast %cst_11 : f32 to vector<16x128xf32>
    %33 = arith.mulf %32, %4 : vector<16x128xf32>
    %cst_12 = arith.constant 7.500000e-01 : f32
    %34 = vector.broadcast %cst_12 : f32 to vector<16x128xf32>
    %35 = arith.subf %34, %33 : vector<16x128xf32>
    %36 = arith.mulf %31, %31 : vector<16x128xf32>
    %37 = arith.mulf %35, %36 : vector<16x128xf32>
    %38 = arith.mulf %37, %25 : vector<16x128xf32>
    %c0_13 = arith.constant 0 : index
    %c0_14 = arith.constant 0 : index
    %39 = vector.load %arg4[%c0_13, %c0_14] : memref<8x128xf32, #tpu.memory_space<vmem>>, vector<8x128xf32>
    %40 = vector.shape_cast %38 : vector<16x128xf32> to vector<2x8x128xf32>
    %cst_15 = arith.constant dense<0.000000e+00> : vector<8x128xf32>
    %41 = vector.multi_reduction <add>, %40, %cst_15 [0] : vector<2x8x128xf32> to vector<8x128xf32>
    %42 = arith.addf %39, %41 : vector<8x128xf32>
    %c0_16 = arith.constant 0 : index
    %c0_17 = arith.constant 0 : index
    %43 = vector.load %arg4[%c0_16, %c0_17] : memref<8x128xf32, #tpu.memory_space<vmem>>, vector<8x128xf32>
    tpu.vector_store %arg4[%c0_16, %c0_17], %42 {strides = array<i32>} : memref<8x128xf32, #tpu.memory_space<vmem>>, vector<8x128xf32>,
    return
  }
  func.func @transform_0(%arg0: i32, %arg1: i32) -> (i32, i32) {
    %c1_i32 = arith.constant 1 : i32
    %0 = arith.muli %arg0, %c1_i32 : i32
    %1 = arith.addi %0, %arg1 : i32
    %c0_i32 = arith.constant 0 : i32
    %2 = arith.minsi %1, %c0_i32 : i32
    %c0_i32_0 = arith.constant 0 : i32
    %c0_i32_1 = arith.constant 0 : i32
    return %2, %c0_i32_0 : i32, i32
  }
  func.func @transform_1(%arg0: i32, %arg1: i32) -> (i32, i32) {
    %c1_i32 = arith.constant 1 : i32
    %0 = arith.muli %arg0, %c1_i32 : i32
    %1 = arith.addi %0, %arg1 : i32
    %c0_i32 = arith.constant 0 : i32
    %2 = arith.minsi %1, %c0_i32 : i32
    %c0_i32_0 = arith.constant 0 : i32
    %c0_i32_1 = arith.constant 0 : i32
    return %2, %c0_i32_0 : i32, i32
  }
  func.func @transform_2(%arg0: i32, %arg1: i32) -> (i32, i32) {
    %c0_i32 = arith.constant 0 : i32
    %c0_i32_0 = arith.constant 0 : i32
    return %arg0, %c0_i32 : i32, i32
  }
}

</mosaic_0001>

<llo_original>
// kernel: tpu_custom_call.1
$region0: #{tpu_custom_call.1}
  #allocation0 [shape = 'u32[]', space=smem, size = 0x4, offset = 0x4, fixed_abs, tag = 'smem constant byte address 0x4 - core index']
  #allocation1 [shape = 'u32[72,128]{1,0:T(1,128)}', space=vmem, size = 0x9000, scoped, tag = 'internal scratch']
  %s0 = inlined_call_operand.hbm [shape: f32[16,128], index: 0, kind: input, shape index: {}]
  %s1 = inlined_call_operand.hbm [shape: f32[16,128], index: 1, kind: input, shape index: {}]
  %s2 = inlined_call_operand.hbm [shape: f32[8,128], index: 2, kind: output, shape index: {}]
  %s3 = sld [smem:[#allocation0]]
  $region30: #{tpu_custom_call.1} parent=0
    _
  %s5 = ssub.s32 1, %s3
  %s6 = scalar_select 0, %s5, %s3
  $region1: #{tpu_custom_call.1} parent=0
    #allocation2 [shape = 'u8[8192]{0}', space=vmem, size = 0x2000, scoped, tag = 'input window, operand 0, single buffered']
    #allocation3 [shape = 's32[1]{0}', space=sflag, size = 0x4, scoped, tag = 'scoped memory for tpu_custom_call.1']
    #allocation4 [shape = 's32[1]{0}', space=sflag, size = 0x4, scoped, tag = 'scoped memory for tpu_custom_call.1']
    #allocation5 [shape = 'u8[8192]{0}', space=vmem, size = 0x2000, scoped, tag = 'input window, operand 1, single buffered']
    #allocation6 [shape = 's32[1]{0}', space=sflag, size = 0x4, scoped, tag = 'scoped memory for tpu_custom_call.1']
    #allocation7 [shape = 'u8[4096]{0}', space=vmem, size = 0x1000, scoped, tag = 'output window, operand 0, single buffered']
    %7 = vsyncpa [#allocation3], 0
    %8 = vsyncpa [#allocation6], 0
    %9 = vsyncpa [#allocation4], 0
    // Predicated region
    $region2: #{tpu_custom_call.1} parent=1 // pred_check
      _
    $region3: #{tpu_custom_call.1} parent=1 // pred_check_branch
      %11 = sbr.rel (0) target = $region5
    $region4: #{tpu_custom_call.1} parent=1 // pred_region
      %s12 = sadd.s32 0, 0
      %p13 = scmp.lt.s32.totalorder %s12, 0
      %s14 = scalar_select %p13, %s12, 0
      %s15 = smul.u32 2, %s14
      %17 = vsyncadd [#allocation3], 0
      %s18 = smul.addr %s15, 8
      %s19 = scalar_lea.hbm %s0, %s18
      %s20 = sshll.u32 %s19, 4
      %s21 = int_to_ptr.hbm [resolvable:$true] %s20
      %s22 = sshll.u32 [#allocation2], 4
      %s23 = int_to_ptr.vmem [resolvable:$true] %s22
      %28 = dma.hbm_to_vmem [thread:$0]  %s21, 256, %s23, [#allocation3], 128, 128, 8
    $region5: #{tpu_custom_call.1} parent=1 // pred_fallthru
      _
    // Predicated region
    $region6: #{tpu_custom_call.1} parent=1 // pred_check
      _
    $region7: #{tpu_custom_call.1} parent=1 // pred_check_branch
      %30 = sbr.rel (0) target = $region9
    $region8: #{tpu_custom_call.1} parent=1 // pred_region
      %s31 = sadd.s32 0, 0
      %p32 = scmp.lt.s32.totalorder %s31, 0
      %s33 = scalar_select %p32, %s31, 0
      %s34 = smul.u32 2, %s33
      %36 = vsyncadd [#allocation6], 0
      %s37 = smul.addr %s34, 8
      %s38 = scalar_lea.hbm %s1, %s37
      %s39 = sshll.u32 %s38, 4
      %s40 = int_to_ptr.hbm [resolvable:$true] %s39
      %s41 = sshll.u32 [#allocation5], 4
      %s42 = int_to_ptr.vmem [resolvable:$true] %s41
      %47 = dma.hbm_to_vmem [thread:$0]  %s40, 256, %s42, [#allocation6], 128, 128, 8
    $region9: #{tpu_custom_call.1} parent=1 // pred_fallthru
      _
    // Predicated region
    $region10: #{tpu_custom_call.1} parent=1 // pred_check
      _
    $region11: #{tpu_custom_call.1} parent=1 // pred_check_branch
      %49 = sbr.rel (0) target = $region13
    $region12: #{tpu_custom_call.1} parent=1 // pred_region
      %51 = dma.done [#allocation3], 256
    $region13: #{tpu_custom_call.1} parent=1 // pred_fallthru
      _
    // Predicated region
    $region14: #{tpu_custom_call.1} parent=1 // pred_check
      _
    $region15: #{tpu_custom_call.1} parent=1 // pred_check_branch
      %53 = sbr.rel (0) target = $region17
    $region16: #{tpu_custom_call.1} parent=1 // pred_region
      %55 = dma.done [#allocation6], 256
    $region17: #{tpu_custom_call.1} parent=1 // pred_fallthru
      _
    %s56 = sadd.s32 0, 0
    %p57 = scmp.lt.s32.totalorder %s56, 0
    %s58 = scalar_select %p57, %s56, 0
    %s59 = smul.u32 2, %s58
    %s60 = sadd.s32 0, 0
    %p61 = scmp.lt.s32.totalorder %s60, 0
    %s62 = scalar_select %p61, %s60, 0
    %s63 = smul.u32 2, %s62
    %p64 = scmp.eq.s32.totalorder 0, 0
    // Predicated region
    $region18: #{tpu_custom_call.1} parent=1 // pred_check
      %p65 = pneg %p64
    $region19: #{tpu_custom_call.1} parent=1 // pred_check_branch
      %67 = sbr.rel (%p65) target = $region21
    $region20: #{tpu_custom_call.1} parent=1 // pred_region
      %68 = vst [vmem:[#allocation7] sm:$0xff] 0.0
    $region21: #{tpu_custom_call.1} parent=1 // pred_fallthru
      _
    %v69 = vld [vmem:[#allocation2] sm:$0xff]
    %v70 = vld [vmem:[#allocation2 + $0x8] sm:$0xff]
    %v71 = vld [vmem:[#allocation5] sm:$0xff]
    %v72 = vld [vmem:[#allocation5 + $0x8] sm:$0xff]
    %v73 = vand.u32 2147483647, %v69
    %v74 = vand.u32 2147483647, %v70
    %v75 = vsub.f32 0.0, %v73
    %v76 = vsub.f32 0.0, %v74
    %v77 = vmul.f32 %v75, 1.442695
    %v78 = vpow.pop %v77
    %v79 = vmul.f32 %v76, 1.442695
    %v80 = vpow.pop %v79
    %v81 = vadd.f32 %v78, 1.0
    %v82 = vadd.f32 %v80, 1.0
    %v83 = vrcp.pop %v81
    %v84 = vmul.f32 %v81, %v83
    %v85 = vsub.f32 1.0, %v84
    %v86 = vmul.f32 %v83, %v85
    %v87 = vadd.f32 %v83, %v86
    %vm88 = vweird.f32 %v81
    %vm89 = vweird.f32 %v83
    %vm90 = vmor %vm88, %vm89
    %v91 = vsel %vm90, %v83, %v87
    %v92 = vand.u32 2147483647, %v81
    %vm93 = vcmp.eq.f32.partialorder %v92, 8.507059e+37
    %v94 = vand.u32 %v81, 2147483648
    %v95 = vor.u32 1.1754944e-38, %v94
    %v96 = vsel %vm93, %v95, %v91
    %v97 = vrcp.pop %v82
    %v98 = vmul.f32 %v82, %v97
    %v99 = vsub.f32 1.0, %v98
    %v100 = vmul.f32 %v97, %v99
    %v101 = vadd.f32 %v97, %v100
    %vm102 = vweird.f32 %v82
    %vm103 = vweird.f32 %v97
    %vm104 = vmor %vm102, %vm103
    %v105 = vsel %vm104, %v97, %v101
    %v106 = vand.u32 2147483647, %v82
    %vm107 = vcmp.eq.f32.partialorder %v106, 8.507059e+37
    %v108 = vand.u32 %v82, 2147483648
    %v109 = vor.u32 1.1754944e-38, %v108
    %v110 = vsel %vm107, %v109, %v105
    %vm111 = vcmp.ge.f32.partialorder %v69, 0.0
    %vm112 = vcmp.ge.f32.partialorder %v70, 0.0
    %v113 = vmul.f32 %v78, %v96
    %v114 = vmul.f32 %v80, %v110
    %v115 = vsel %vm111, %v96, %v113
    %v116 = vsel %vm112, %v110, %v114
    %v117 = vmax.f32 %v115, 1e-06
    %v118 = vmax.f32 %v116, 1e-06
    %v119 = vmin.f32 %v117, 0.999999
    %v120 = vmin.f32 %v118, 0.999999
    %v121 = vmax.f32 %v69, 0.0
    %v122 = vmax.f32 %v70, 0.0
    %v123 = vmul.f32 %v69, %v71
    %v124 = vmul.f32 %v70, %v72
    %v125 = vsub.f32 %v121, %v123
    %v126 = vsub.f32 %v122, %v124
    %v127 = vadd.f32 %v78, 1.0
    %v128 = vlog2.pop %v127
    %v129 = vmul.f32 %v128, 0.6931472
    %v130 = vmul.f32 -0.5, %v78
    %v131 = vadd.f32 %v130, 1.0
    %v132 = vmul.f32 %v131, %v78
    %v133 = vand.u32 2147483647, %v78
    %vm134 = vcmp.lt.f32.partialorder %v133, 0.0004427343
    %v135 = vsel %vm134, %v132, %v129
    %v136 = vadd.f32 %v80, 1.0
    %v137 = vlog2.pop %v136
    %v138 = vmul.f32 %v137, 0.6931472
    %v139 = vmul.f32 -0.5, %v80
    %v140 = vadd.f32 %v139, 1.0
    %v141 = vmul.f32 %v140, %v80
    %v142 = vand.u32 2147483647, %v80
    %vm143 = vcmp.lt.f32.partialorder %v142, 0.0004427343
    %v144 = vsel %vm143, %v141, %v138
    %v145 = vadd.f32 %v125, %v135
    %v146 = vadd.f32 %v126, %v144
    %v147 = vmul.f32 %v71, 2.0
    %v148 = vmul.f32 %v72, 2.0
    %v149 = vsub.f32 1.0, %v147
    %v150 = vsub.f32 1.0, %v148
    %v151 = vmul.f32 %v119, %v149
    %v152 = vmul.f32 %v120, %v150
    %v153 = vadd.f32 %v71, %v151
    %v154 = vadd.f32 %v72, %v152
    %v155 = vmul.f32 %v71, 0.5
    %v156 = vmul.f32 %v72, 0.5
    %v157 = vsub.f32 0.75, %v155
    %v158 = vsub.f32 0.75, %v156
    %v159 = vmul.f32 %v153, %v153
    %v160 = vmul.f32 %v154, %v154
    %v161 = vmul.f32 %v157, %v159
    %v162 = vmul.f32 %v158, %v160
    %v163 = vmul.f32 %v161, %v145
    %v164 = vmul.f32 %v162, %v146
    %v165 = vld [vmem:[#allocation7] sm:$0xff]
    %v166 = vadd.f32 %v163, %v164
    %v167 = vadd.f32 %v165, %v166
    %168 = vst [vmem:[#allocation7] sm:$0xff] %v167
    // Predicated region
    $region22: #{tpu_custom_call.1} parent=1 // pred_check
      _
    $region23: #{tpu_custom_call.1} parent=1 // pred_check_branch
      %170 = sbr.rel (0) target = $region25
    $region24: #{tpu_custom_call.1} parent=1 // pred_region
      %172 = vsyncadd [#allocation4], 0
      %s174 = sshll.u32 [#allocation7], 4
      %s175 = int_to_ptr.vmem [resolvable:$true] %s174
      %s176 = sshll.u32 %s2, 4
      %s177 = int_to_ptr.hbm [resolvable:$true] %s176
      %179 = dma.vmem_to_hbm [thread:$0]  %s175, 128, %s177, [#allocation4]
    $region25: #{tpu_custom_call.1} parent=1 // pred_fallthru
      _
    // Predicated region
    $region26: #{tpu_custom_call.1} parent=1 // pred_check
      _
    $region27: #{tpu_custom_call.1} parent=1 // pred_check_branch
      %181 = sbr.rel (0) target = $region29
    $region28: #{tpu_custom_call.1} parent=1 // pred_region
      %183 = dma.done [#allocation4], 128
    $region29: #{tpu_custom_call.1} parent=1 // pred_fallthru
      _
    %184 = vsyncpa [#allocation3], 1
    %185 = vsyncpa [#allocation6], 1
    %186 = vsyncpa [#allocation4], 1

</llo_original>
